<compile_context>
chip_gen: v7x
topology: tpu7x:2x2x1
jax: 0.10.0
libtpu: 0.0.40
codegen_flags: <defaults>
</compile_context>

<pallas_src>
import jax
import jax.numpy as jnp
from jax.experimental import pallas as pl
from jax.experimental.pallas import tpu as pltpu


def _rope_kernel_full(pos_ref, inv_ref, cos_ref, sin_ref):
    # pos_ref: (tile, 1) int32 ; inv_ref: (1, dim) f32 (already duplicated)
    pos = pos_ref[...].astype(jnp.float32)        # (tile, 1)
    inv = inv_ref[...]                            # (1, dim)
    freqs = pos * inv                             # (tile, dim) -- lane-splat broadcast
    # TODO(synk): on v7x (VALU/EUP-bound) replace the two transcendental calls
    # with a hand-fused sincos sharing one Cody-Waite range reduction.
    cos_ref[...] = jnp.cos(freqs).astype(cos_ref.dtype)
    sin_ref[...] = jnp.sin(freqs).astype(sin_ref.dtype)


def _rope_kernel_half(pos_ref, inv_ref, cos_ref, sin_ref):
    # pos_ref: (tile, 1) int32 ; inv_ref: (1, half) f32, half % 128 == 0
    pos = pos_ref[...].astype(jnp.float32)        # (tile, 1)
    inv = inv_ref[...]                            # (1, half)
    half = inv.shape[-1]
    freqs = pos * inv                             # (tile, half)
    c = jnp.cos(freqs).astype(cos_ref.dtype)      # transcendentals on unique lanes only
    s = jnp.sin(freqs).astype(sin_ref.dtype)
    # Two aligned, unmasked lane-slice stores (half is a multiple of 128).
    cos_ref[:, :half] = c
    cos_ref[:, half:] = c
    sin_ref[:, :half] = s
    sin_ref[:, half:] = s


def rotary_embedding(x, position_ids, inv_freq, tile_rows=4096):
    """Returns (cos, sin) of shape (B, S, dim) in x.dtype, matching the
    PyTorch RotaryEmbedding.forward semantics (x only supplies the dtype)."""
    B, S = position_ids.shape
    half = inv_freq.shape[-1]
    dim = 2 * half
    rows = B * S

    # Positions are cast to f32 in-kernel; exact up to ~2^24 (any realistic ctx).
    pos = position_ids.reshape(rows, 1).astype(jnp.int32)
    out_dtype = jnp.dtype(x.dtype)
    out_itemsize = out_dtype.itemsize

    def _round_up(a, m):
        return -(-a // m) * m

    # ---- row-tile selection --------------------------------------------------
    # (a) budget cap: double-buffered (cos, sin) output blocks <= ~32 MiB, far
    #     below v7x's 64 MiB physical VMEM even with f32 intermediates on top.
    tile_cap = max(16, ((32 << 20) // (4 * dim * out_itemsize)) // 16 * 16)
    # (b) keep >= 2 grid steps whenever rows allow it so ("parallel",) can shard
    #     rows across both v7x TensorCores instead of silently serializing.
    two_step = _round_up(pl.cdiv(rows, 2), 16)
    # (c) tile is always a multiple of 16 (f32/bf16 sublane packing), >= 16,
    #     regardless of the caller-supplied tile_rows.
    tile = max(16, _round_up(min(tile_rows, tile_cap, two_step), 16))

    # No pad / no output slice copy: cdiv grid + true (rows, dim) out_shape;
    # Pallas masks the ragged final block on writeback (overhang is discarded).
    grid = (pl.cdiv(rows, tile),)

    use_half = (half % 128 == 0)
    if use_half:
        inv_arg = inv_freq.reshape(1, half).astype(jnp.float32)
        kernel = _rope_kernel_half
        inv_block = (1, half)
    else:
        # Hoist the duplication out of the kernel: (1, dim) duplicated table.
        inv_arg = jnp.concatenate([inv_freq, inv_freq]).reshape(1, dim).astype(jnp.float32)
        kernel = _rope_kernel_full
        inv_block = (1, dim)

    cost = pl.CostEstimate(
        flops=rows * (half if use_half else dim),              # pos * inv multiplies
        transcendentals=rows * (dim if use_half else 2 * dim),
        bytes_accessed=rows * 4 + inv_arg.size * 4 + 2 * rows * dim * out_itemsize,
    )

    cos, sin = pl.pallas_call(
        kernel,
        out_shape=(
            jax.ShapeDtypeStruct((rows, dim), out_dtype),
            jax.ShapeDtypeStruct((rows, dim), out_dtype),
        ),
        grid=grid,
        in_specs=[
            pl.BlockSpec((tile, 1), lambda i: (i, 0)),
            pl.BlockSpec(inv_block, lambda i: (0, 0)),         # VMEM-resident across steps
        ],
        out_specs=(
            pl.BlockSpec((tile, dim), lambda i: (i, 0)),
            pl.BlockSpec((tile, dim), lambda i: (i, 0)),
        ),
        compiler_params=pltpu.CompilerParams(
            dimension_semantics=("parallel",),
            # v5e's scoped-VMEM default is only 16 MiB; larger tiles need
            # headroom (64 MiB is still within every generation's physical VMEM).
            vmem_limit_bytes=64 << 20,
        ),
        cost_estimate=cost,
    )(pos, inv_arg)

    # TODO(synk): biggest remaining lever is to not materialize redundant data at
    # all — emit only the unique (rows, half) freqs (duplicate at the consumer)
    # and/or fuse table generation into the RoPE-apply / attention kernel instead
    # of writing two (B, S, dim) tables to HBM.
    # TODO(synk): for v5e with dim=128 (half=64), pack two rows' unique freqs into
    # one 128-lane vreg (+ pltpu.roll rebuild) if a bundle dump shows VALU as the
    # critical unit.
    return cos.reshape(B, S, dim), sin.reshape(B, S, dim)


def make_inv_freq(dim, base=10000.0):
    # Matches: 1.0 / base ** (arange(0, dim, 2).float() / dim)
    exponents = jnp.arange(0, dim, 2, dtype=jnp.int32).astype(jnp.float32) / dim
    return 1.0 / (base ** exponents)


def _reference(x, position_ids, inv_freq):
    pos_f = position_ids.astype(jnp.float32)
    freqs = pos_f[:, :, None] * inv_freq[None, None, :]
    emb = jnp.concatenate([freqs, freqs], axis=-1)
    return jnp.cos(emb).astype(x.dtype), jnp.sin(emb).astype(x.dtype)


if __name__ == "__main__":
    key = jax.random.PRNGKey(0)

    # Case 1: dim=128 (half=64)  -> full path (pre-duplicated inv_freq).
    # Case 2: dim=256 (half=128) -> half-compute / double-store path.
    # Case 3: rows=40 (bf16)     -> ragged final grid block (no-pad/no-slice path).
    cases = [
        (2, 8, 128, jnp.float32),
        (2, 8, 256, jnp.float32),
        (1, 40, 128, jnp.bfloat16),
    ]
    for (B, S, DIM, dtype) in cases:
        key, kx, kp = jax.random.split(key, 3)
        x = jax.random.normal(kx, (B, S, DIM), dtype=jnp.float32).astype(dtype)
        position_ids = jax.random.randint(kp, (B, S), 0, 8192, dtype=jnp.int32)
        inv_freq = make_inv_freq(DIM, base=10000.0)

        cos, sin = rotary_embedding(x, position_ids, inv_freq)
        cos = jax.block_until_ready(cos)
        sin = jax.block_until_ready(sin)

        cos_ref, sin_ref = _reference(x, position_ids, inv_freq)
        assert cos.shape == (B, S, DIM) and sin.shape == (B, S, DIM)
        assert cos.dtype == x.dtype and sin.dtype == x.dtype
        tol = 1e-5 if dtype == jnp.float32 else 1e-2
        assert jnp.allclose(cos.astype(jnp.float32), cos_ref.astype(jnp.float32),
                            atol=tol, rtol=tol)
        assert jnp.allclose(sin.astype(jnp.float32), sin_ref.astype(jnp.float32),
                            atol=tol, rtol=tol)

    print("KERNEL_OK")
</pallas_src>

<mosaic_0001>
module attributes {stable_mosaic.version = 11 : i64} {
  func.func @_rope_kernel_full(%arg0: i32, %arg1: memref<16x1xi32, #tpu.memory_space<vmem>>, %arg2: memref<1x128xf32, #tpu.memory_space<vmem>>, %arg3: memref<16x128xf32, #tpu.memory_space<vmem>>, %arg4: memref<16x128xf32, #tpu.memory_space<vmem>>) attributes {dimension_semantics = [#tpu.dimension_semantics<parallel>], iteration_bounds = array<i64: 1>, scalar_prefetch = 0 : i64, scratch_operands = 0 : i64, tpu.core_type = #tpu.core_type<tc>, window_params = [{transform_indices = @transform_0, window_bounds = array<i64: 16, 1>}, {pipeline_mode = #tpu.pipeline_mode<synchronous>, transform_indices = @transform_1, window_bounds = array<i64: 1, 128>}, {transform_indices = @transform_2, window_bounds = array<i64: 16, 128>}, {transform_indices = @transform_3, window_bounds = array<i64: 16, 128>}]} {
    %c0 = arith.constant 0 : index
    %c0_0 = arith.constant 0 : index
    %0 = vector.load %arg1[%c0, %c0_0] : memref<16x1xi32, #tpu.memory_space<vmem>>, vector<16x1xi32>
    %1 = arith.sitofp %0 : vector<16x1xi32> to vector<16x1xf32>
    %c0_1 = arith.constant 0 : index
    %c0_2 = arith.constant 0 : index
    %2 = vector.load %arg2[%c0_1, %c0_2] : memref<1x128xf32, #tpu.memory_space<vmem>>, vector<1x128xf32>
    %3 = vector.broadcast %1 : vector<16x1xf32> to vector<16x128xf32>
    %4 = vector.broadcast %2 : vector<1x128xf32> to vector<16x128xf32>
    %5 = arith.mulf %3, %4 : vector<16x128xf32>
    %6 = math.cos %5 : vector<16x128xf32>
    %c0_3 = arith.constant 0 : index
    %c0_4 = arith.constant 0 : index
    %7 = vector.load %arg3[%c0_3, %c0_4] : memref<16x128xf32, #tpu.memory_space<vmem>>, vector<16x128xf32>
    tpu.vector_store %arg3[%c0_3, %c0_4], %6 {strides = array<i32>} : memref<16x128xf32, #tpu.memory_space<vmem>>, vector<16x128xf32>,
    %8 = math.sin %5 : vector<16x128xf32>
    %c0_5 = arith.constant 0 : index
    %c0_6 = arith.constant 0 : index
    %9 = vector.load %arg4[%c0_5, %c0_6] : memref<16x128xf32, #tpu.memory_space<vmem>>, vector<16x128xf32>
    tpu.vector_store %arg4[%c0_5, %c0_6], %8 {strides = array<i32>} : memref<16x128xf32, #tpu.memory_space<vmem>>, vector<16x128xf32>,
    return
  }
  func.func @transform_0(%arg0: i32) -> (i32, i32) {
    %c0_i32 = arith.constant 0 : i32
    %c0_i32_0 = arith.constant 0 : i32
    return %arg0, %c0_i32 : i32, i32
  }
  func.func @transform_1(%arg0: i32) -> (i32, i32) {
    %c0_i32 = arith.constant 0 : i32
    %c0_i32_0 = arith.constant 0 : i32
    %c0_i32_1 = arith.constant 0 : i32
    return %c0_i32, %c0_i32_0 : i32, i32
  }
  func.func @transform_2(%arg0: i32) -> (i32, i32) {
    %c0_i32 = arith.constant 0 : i32
    %c0_i32_0 = arith.constant 0 : i32
    return %arg0, %c0_i32 : i32, i32
  }
  func.func @transform_3(%arg0: i32) -> (i32, i32) {
    %c0_i32 = arith.constant 0 : i32
    %c0_i32_0 = arith.constant 0 : i32
    return %arg0, %c0_i32 : i32, i32
  }
}

</mosaic_0001>

<llo_original>
// kernel: tpu_custom_call.1
$region0: #{tpu_custom_call.1}
  #allocation0 [shape = 'u32[]', space=smem, size = 0x4, offset = 0x4, fixed_abs, tag = 'smem constant byte address 0x4 - core index']
  #allocation1 [shape = 'u32[144,128]{1,0:T(1,128)}', space=vmem, size = 0x12000, scoped, tag = 'internal scratch']
  %s0 = inlined_call_operand.hbm [shape: s32[16,1], index: 0, kind: input, shape index: {}]
  %s1 = inlined_call_operand.hbm [shape: f32[1,128], index: 1, kind: input, shape index: {}]
  %s2 = inlined_call_operand.hbm [shape: f32[16,128], index: 2, kind: output, shape index: {0}]
  %s3 = inlined_call_operand.hbm [shape: f32[16,128], index: 3, kind: output, shape index: {1}]
  %4 = xla_tuple %s2, %s3
  %s5 = sld [smem:[#allocation0]]
  $region34: #{tpu_custom_call.1} parent=0
    _
  %s7 = ssub.s32 1, %s5
  %s8 = scalar_select 0, %s7, %s5
  $region1: #{tpu_custom_call.1} parent=0
    #allocation2 [shape = 'u8[8192]{0}', space=vmem, size = 0x2000, scoped, tag = 'input window, operand 0, single buffered']
    #allocation3 [shape = 's32[1]{0}', space=sflag, size = 0x4, scoped, tag = 'scoped memory for tpu_custom_call.1']
    #allocation4 [shape = 's32[1]{0}', space=sflag, size = 0x4, scoped, tag = 'scoped memory for tpu_custom_call.1']
    #allocation5 [shape = 'u8[512]{0}', space=vmem, size = 0x400, scoped, tag = 'input window, operand 1, single buffered']
    #allocation6 [shape = 's32[1]{0}', space=sflag, size = 0x4, scoped, tag = 'scoped memory for tpu_custom_call.1']
    #allocation7 [shape = 'u8[8192]{0}', space=vmem, size = 0x2000, scoped, tag = 'output window, operand 0, single buffered']
    #allocation8 [shape = 'u8[8192]{0}', space=vmem, size = 0x2000, scoped, tag = 'output window, operand 1, single buffered']
    #allocation9 [shape = 's32[1]{0}', space=sflag, size = 0x4, scoped, tag = 'scoped memory for tpu_custom_call.1']
    %9 = vsyncpa [#allocation3], 0
    %10 = vsyncpa [#allocation6], 0
    %11 = vsyncpa [#allocation4], 0
    %12 = vsyncpa [#allocation9], 0
    // Predicated region
    $region2: #{tpu_custom_call.1} parent=1 // pred_check
      _
    $region3: #{tpu_custom_call.1} parent=1 // pred_check_branch
      %14 = sbr.rel (0) target = $region5
    $region4: #{tpu_custom_call.1} parent=1 // pred_region
      %s16 = ssub.s32 256, 256
      %17 = vsyncadd [#allocation3], %s16
      %s18 = sshll.u32 [#allocation2], 4
      %s19 = int_to_ptr.vmem [resolvable:$true] %s18
      %24 = dma.hbm_to_vmem [thread:$0]  %s0, 256, %s19, [#allocation3], 128, 128, 8
    $region5: #{tpu_custom_call.1} parent=1 // pred_fallthru
      _
    // Predicated region
    $region6: #{tpu_custom_call.1} parent=1 // pred_check
      _
    $region7: #{tpu_custom_call.1} parent=1 // pred_check_branch
      %26 = sbr.rel (0) target = $region9
    $region8: #{tpu_custom_call.1} parent=1 // pred_region
      %s28 = ssub.s32 16, 16
      %29 = vsyncadd [#allocation6], %s28
      %s31 = sshll.u32 [#allocation5], 4
      %s32 = int_to_ptr.vmem [resolvable:$true] %s31
      %34 = dma.hbm_to_vmem [thread:$0]  %s1, 16, %s32, [#allocation6]
    $region9: #{tpu_custom_call.1} parent=1 // pred_fallthru
      _
    // Predicated region
    $region10: #{tpu_custom_call.1} parent=1 // pred_check
      _
    $region11: #{tpu_custom_call.1} parent=1 // pred_check_branch
      %36 = sbr.rel (0) target = $region13
    $region12: #{tpu_custom_call.1} parent=1 // pred_region
      %37 = dma.done [#allocation3], 256
    $region13: #{tpu_custom_call.1} parent=1 // pred_fallthru
      _
    // Predicated region
    $region14: #{tpu_custom_call.1} parent=1 // pred_check
      _
    $region15: #{tpu_custom_call.1} parent=1 // pred_check_branch
      %39 = sbr.rel (0) target = $region17
    $region16: #{tpu_custom_call.1} parent=1 // pred_region
      %40 = dma.done [#allocation6], 16
    $region17: #{tpu_custom_call.1} parent=1 // pred_fallthru
      _
    %v41 = vld [vmem:[#allocation2] sm:$0xff]
    %v42 = vld [vmem:[#allocation2 + $0x8] sm:$0xff]
    %v43 = vcvt.s32.f32 %v41
    %v44 = vcvt.s32.f32 %v42
    %v45 = vld [vmem:[#allocation5] sm:$0x1]
    %47 = vset.pattern.permute.xlu0 0
    %48 = vperm.xlu0 %47, %v43
    %v49 = vpop.permute.xlu0 %48
    %52 = vset.pattern.permute.xlu0 0
    %53 = vperm.xlu0 %52, %v44
    %v54 = vpop.permute.xlu0 %53
    %v57 = vlaneseq
    %v58 = vshrl.u32 %v57, 7
    %v59 = vsub.s32 0, %v58
    %v60 = vrot.slane %v45, %v59
    %v62 = vmul.f32 %v49, %v60
    %v63 = vmul.f32 %v54, %v60
    %v64 = vand.u32 2147483647, %v62
    %vm65 = vcmp.le.f32.partialorder %v64, 0.7853982
    %vm66 = vcmp.lt.s32.totalorder %v62, 0
    %v67 = vand.u32 %v62, 2139095040
    %v68 = vshrl.u32 %v67, 23
    %v69 = vsub.s32 %v68, 127
    %v70 = vand.u32 2147483647, %v62
    %v71 = vand.u32 %v70, 8388607
    %v72 = vor.u32 %v71, 8388608
    %v73 = vsub.s32 0, %v72
    %v74 = vadd.s32 %v69, 1
    %vm75 = vcmp.gt.s32.totalorder %v74, 0
    %v76 = vsel %vm75, %v74, 0
    %v77 = vshrl.u32 %v76, 5
    %v78 = vand.u32 %v76, 31
    %v79 = vsub.s32 32, %v78
    %v80 = vshrl.u32 683565275, %v79
    %v81 = vshll.u32 683565275, %v78
    %v82 = vshrl.u32 2475754826, %v79
    %v83 = vor.u32 %v81, %v82
    %v84 = vshll.u32 2475754826, %v78
    %v85 = vshrl.u32 2131351028, %v79
    %v86 = vor.u32 %v84, %v85
    %v87 = vshll.u32 2131351028, %v78
    %v88 = vshrl.u32 2102212464, %v79
    %v89 = vor.u32 %v87, %v88
    %v90 = vshll.u32 2102212464, %v78
    %v91 = vshrl.u32 920167782, %v79
    %v92 = vor.u32 %v90, %v91
    %v93 = vshll.u32 920167782, %v78
    %v94 = vshrl.u32 1326507024, %v79
    %v95 = vor.u32 %v93, %v94
    %vm96 = vcmp.lt.s32.totalorder %v77, 1
    %vm97 = vcmp.lt.s32.totalorder %v77, 2
    %vm98 = vcmp.lt.s32.totalorder %v77, 3
    %vm99 = vcmp.lt.s32.totalorder %v77, 4
    %v100 = vsel %vm96, %v80, %v83
    %v101 = vsel %vm99, %v89, 2102212464
    %v102 = vsel %vm98, %v86, %v101
    %v103 = vsel %vm97, %v100, %v102
    %v104 = vsel %vm96, %v83, %v86
    %v105 = vsel %vm99, %v92, 920167782
    %v106 = vsel %vm98, %v89, %v105
    %v107 = vsel %vm97, %v104, %v106
    %v108 = vsel %vm96, %v86, %v89
    %v109 = vsel %vm99, %v95, 1326507024
    %v110 = vsel %vm98, %v92, %v109
    %v111 = vsel %vm97, %v108, %v110
    %v112 = vshll.u32 %v72, 8
    %v113 = vmul.u32.u64.compose %v112, %v111
    %v114 = vextract.low.u32 %v113
    %v115 = vextract.high.u32 %v113
    %v116 = vmul.u32.u64.compose %v112, %v107
    %v117 = vextract.low.u32 %v116
    %v118 = vextract.high.u32 %v116
    %v119 = vmul.u32 %v112, %v103
    %v120 = vadd.s32 %v115, %v117
    %vm121 = vc.u32 %v115, %v117
    %v122 = vadd.s32 %v118, 1
    %v123 = vsel %vm121, %v122, %v118
    %v124 = vadd.s32 %v119, %v123
    %v125 = vadd.s32 %v124, 536870912
    %v126 = vshrl.u32 %v125, 30
    %v127 = vshll.u32 %v126, 30
    %v128 = vsub.s32 %v124, %v127
    %vm129 = vcmp.lt.s32.totalorder %v128, 0
    %v130 = vsub.s32 0, %v128
    %v131 = vsel %vm129, %v130, %v128
    %v132 = vclz %v131
    %v133 = vsub.s32 %v132, 2
    %vm134 = vcmp.gt.s32.totalorder 0, %v133
    %v135 = vsel %vm134, 0, %v133
    %v136 = vsub.s32 32, %v135
    %v137 = vshll.u32 %v128, %v135
    %v138 = vshrl.u32 %v120, %v136
    %v139 = vor.u32 %v137, %v138
    %v140 = vsub.s32 4294967266, %v135
    %v141 = vadd.s32 %v140, 127
    %v142 = vshll.u32 %v141, 23
    %v143 = vor.u32 4788187, %v142
    %v144 = vand.u32 2147483647, %v143
    %v146 = vcvt.s32.f32 %v139
    %v147 = vmul.f32 %v146, %v144
    %v148 = vxor.u32 %v147, 2147483648
    %v149 = vsel %vm66, %v148, %v147
    %v150 = vsub.s32 4, %v126
    %v151 = vsel %vm66, %v150, %v126
    %v152 = vsel %vm65, %v62, %v149
    %v153 = vsel %vm65, 0, %v151
    %v154 = vcosq.f32.pop %v152
    %v155 = vsinq.f32.pop %v152
    %vm156 = vweird.f32 %v62
    %v157 = vand.u32 %v153, 3
    %vm158 = vcmp.lt.s32.totalorder %v157, 2
    %vm159 = vcmp.eq.s32.totalorder %v157, 0
    %v160 = vxor.u32 %v155, 2147483648
    %v161 = vsel %vm159, %v154, %v160
    %vm162 = vcmp.eq.s32.totalorder %v157, 2
    %v163 = vxor.u32 %v154, 2147483648
    %v164 = vsel %vm162, %v163, %v155
    %v165 = vsel %vm158, %v161, %v164
    %v166 = vsel %vm156, nan, %v165
    %v167 = vand.u32 2147483647, %v63
    %vm168 = vcmp.le.f32.partialorder %v167, 0.7853982
    %vm169 = vcmp.lt.s32.totalorder %v63, 0
    %v170 = vand.u32 %v63, 2139095040
    %v171 = vshrl.u32 %v170, 23
    %v172 = vsub.s32 %v171, 127
    %v173 = vand.u32 2147483647, %v63
    %v174 = vand.u32 %v173, 8388607
    %v175 = vor.u32 %v174, 8388608
    %v176 = vsub.s32 0, %v175
    %v177 = vadd.s32 %v172, 1
    %vm178 = vcmp.gt.s32.totalorder %v177, 0
    %v179 = vsel %vm178, %v177, 0
    %v180 = vshrl.u32 %v179, 5
    %v181 = vand.u32 %v179, 31
    %v182 = vsub.s32 32, %v181
    %v183 = vshrl.u32 683565275, %v182
    %v184 = vshll.u32 683565275, %v181
    %v185 = vshrl.u32 2475754826, %v182
    %v186 = vor.u32 %v184, %v185
    %v187 = vshll.u32 2475754826, %v181
    %v188 = vshrl.u32 2131351028, %v182
    %v189 = vor.u32 %v187, %v188
    %v190 = vshll.u32 2131351028, %v181
    %v191 = vshrl.u32 2102212464, %v182
    %v192 = vor.u32 %v190, %v191
    %v193 = vshll.u32 2102212464, %v181
    %v194 = vshrl.u32 920167782, %v182
    %v195 = vor.u32 %v193, %v194
    %v196 = vshll.u32 920167782, %v181
    %v197 = vshrl.u32 1326507024, %v182
    %v198 = vor.u32 %v196, %v197
    %vm199 = vcmp.lt.s32.totalorder %v180, 1
    %vm200 = vcmp.lt.s32.totalorder %v180, 2
    %vm201 = vcmp.lt.s32.totalorder %v180, 3
    %vm202 = vcmp.lt.s32.totalorder %v180, 4
    %v203 = vsel %vm199, %v183, %v186
    %v204 = vsel %vm202, %v192, 2102212464
    %v205 = vsel %vm201, %v189, %v204
    %v206 = vsel %vm200, %v203, %v205
    %v207 = vsel %vm199, %v186, %v189
    %v208 = vsel %vm202, %v195, 920167782
    %v209 = vsel %vm201, %v192, %v208
    %v210 = vsel %vm200, %v207, %v209
    %v211 = vsel %vm199, %v189, %v192
    %v212 = vsel %vm202, %v198, 1326507024
    %v213 = vsel %vm201, %v195, %v212
    %v214 = vsel %vm200, %v211, %v213
    %v215 = vshll.u32 %v175, 8
    %v216 = vmul.u32.u64.compose %v215, %v214
    %v217 = vextract.low.u32 %v216
    %v218 = vextract.high.u32 %v216
    %v219 = vmul.u32.u64.compose %v215, %v210
    %v220 = vextract.low.u32 %v219
    %v221 = vextract.high.u32 %v219
    %v222 = vmul.u32 %v215, %v206
    %v223 = vadd.s32 %v218, %v220
    %vm224 = vc.u32 %v218, %v220
    %v225 = vadd.s32 %v221, 1
    %v226 = vsel %vm224, %v225, %v221
    %v227 = vadd.s32 %v222, %v226
    %v228 = vadd.s32 %v227, 536870912
    %v229 = vshrl.u32 %v228, 30
    %v230 = vshll.u32 %v229, 30
    %v231 = vsub.s32 %v227, %v230
    %vm232 = vcmp.lt.s32.totalorder %v231, 0
    %v233 = vsub.s32 0, %v231
    %v234 = vsel %vm232, %v233, %v231
    %v235 = vclz %v234
    %v236 = vsub.s32 %v235, 2
    %vm237 = vcmp.gt.s32.totalorder 0, %v236
    %v238 = vsel %vm237, 0, %v236
    %v239 = vsub.s32 32, %v238
    %v240 = vshll.u32 %v231, %v238
    %v241 = vshrl.u32 %v223, %v239
    %v242 = vor.u32 %v240, %v241
    %v243 = vsub.s32 4294967266, %v238
    %v244 = vadd.s32 %v243, 127
    %v245 = vshll.u32 %v244, 23
    %v246 = vor.u32 4788187, %v245
    %v247 = vand.u32 2147483647, %v246
    %v249 = vcvt.s32.f32 %v242
    %v250 = vmul.f32 %v249, %v247
    %v251 = vxor.u32 %v250, 2147483648
    %v252 = vsel %vm169, %v251, %v250
    %v253 = vsub.s32 4, %v229
    %v254 = vsel %vm169, %v253, %v229
    %v255 = vsel %vm168, %v63, %v252
    %v256 = vsel %vm168, 0, %v254
    %v257 = vcosq.f32.pop %v255
    %v258 = vsinq.f32.pop %v255
    %vm259 = vweird.f32 %v63
    %v260 = vand.u32 %v256, 3
    %vm261 = vcmp.lt.s32.totalorder %v260, 2
    %vm262 = vcmp.eq.s32.totalorder %v260, 0
    %v263 = vxor.u32 %v258, 2147483648
    %v264 = vsel %vm262, %v257, %v263
    %vm265 = vcmp.eq.s32.totalorder %v260, 2
    %v266 = vxor.u32 %v257, 2147483648
    %v267 = vsel %vm265, %v266, %v258
    %v268 = vsel %vm261, %v264, %v267
    %v269 = vsel %vm259, nan, %v268
    %270 = vst [vmem:[#allocation7] sm:$0xff] %v166
    %271 = vst [vmem:[#allocation7 + $0x8] sm:$0xff] %v269
    %v272 = vand.u32 2147483647, %v62
    %vm273 = vcmp.le.f32.partialorder %v272, 0.7853982
    %vm274 = vcmp.lt.s32.totalorder %v62, 0
    %v275 = vand.u32 %v62, 2139095040
    %v276 = vshrl.u32 %v275, 23
    %v277 = vsub.s32 %v276, 127
    %v278 = vand.u32 2147483647, %v62
    %v279 = vand.u32 %v278, 8388607
    %v280 = vor.u32 %v279, 8388608
    %v281 = vsub.s32 0, %v280
    %v282 = vadd.s32 %v277, 1
    %vm283 = vcmp.gt.s32.totalorder %v282, 0
    %v284 = vsel %vm283, %v282, 0
    %v285 = vshrl.u32 %v284, 5
    %v286 = vand.u32 %v284, 31
    %v287 = vsub.s32 32, %v286
    %v288 = vshrl.u32 683565275, %v287
    %v289 = vshll.u32 683565275, %v286
    %v290 = vshrl.u32 2475754826, %v287
    %v291 = vor.u32 %v289, %v290
    %v292 = vshll.u32 2475754826, %v286
    %v293 = vshrl.u32 2131351028, %v287
    %v294 = vor.u32 %v292, %v293
    %v295 = vshll.u32 2131351028, %v286
    %v296 = vshrl.u32 2102212464, %v287
    %v297 = vor.u32 %v295, %v296
    %v298 = vshll.u32 2102212464, %v286
    %v299 = vshrl.u32 920167782, %v287
    %v300 = vor.u32 %v298, %v299
    %v301 = vshll.u32 920167782, %v286
    %v302 = vshrl.u32 1326507024, %v287
    %v303 = vor.u32 %v301, %v302
    %vm304 = vcmp.lt.s32.totalorder %v285, 1
    %vm305 = vcmp.lt.s32.totalorder %v285, 2
    %vm306 = vcmp.lt.s32.totalorder %v285, 3
    %vm307 = vcmp.lt.s32.totalorder %v285, 4
    %v308 = vsel %vm304, %v288, %v291
    %v309 = vsel %vm307, %v297, 2102212464
    %v310 = vsel %vm306, %v294, %v309
    %v311 = vsel %vm305, %v308, %v310
    %v312 = vsel %vm304, %v291, %v294
    %v313 = vsel %vm307, %v300, 920167782
    %v314 = vsel %vm306, %v297, %v313
    %v315 = vsel %vm305, %v312, %v314
    %v316 = vsel %vm304, %v294, %v297
    %v317 = vsel %vm307, %v303, 1326507024
    %v318 = vsel %vm306, %v300, %v317
    %v319 = vsel %vm305, %v316, %v318
    %v320 = vshll.u32 %v280, 8
    %v321 = vmul.u32.u64.compose %v320, %v319
    %v322 = vextract.low.u32 %v321
    %v323 = vextract.high.u32 %v321
    %v324 = vmul.u32.u64.compose %v320, %v315
    %v325 = vextract.low.u32 %v324
    %v326 = vextract.high.u32 %v324
    %v327 = vmul.u32 %v320, %v311
    %v328 = vadd.s32 %v323, %v325
    %vm329 = vc.u32 %v323, %v325
    %v330 = vadd.s32 %v326, 1
    %v331 = vsel %vm329, %v330, %v326
    %v332 = vadd.s32 %v327, %v331
    %v333 = vadd.s32 %v332, 536870912
    %v334 = vshrl.u32 %v333, 30
    %v335 = vshll.u32 %v334, 30
    %v336 = vsub.s32 %v332, %v335
    %vm337 = vcmp.lt.s32.totalorder %v336, 0
    %v338 = vsub.s32 0, %v336
    %v339 = vsel %vm337, %v338, %v336
    %v340 = vclz %v339
    %v341 = vsub.s32 %v340, 2
    %vm342 = vcmp.gt.s32.totalorder 0, %v341
    %v343 = vsel %vm342, 0, %v341
    %v344 = vsub.s32 32, %v343
    %v345 = vshll.u32 %v336, %v343
    %v346 = vshrl.u32 %v328, %v344
    %v347 = vor.u32 %v345, %v346
    %v348 = vsub.s32 4294967266, %v343
    %v349 = vadd.s32 %v348, 127
    %v350 = vshll.u32 %v349, 23
    %v351 = vor.u32 4788187, %v350
    %v352 = vand.u32 2147483647, %v351
    %v354 = vcvt.s32.f32 %v347
    %v355 = vmul.f32 %v354, %v352
    %v356 = vxor.u32 %v355, 2147483648
    %v357 = vsel %vm274, %v356, %v355
    %v358 = vsub.s32 4, %v334
    %v359 = vsel %vm274, %v358, %v334
    %v360 = vsel %vm273, %v62, %v357
    %v361 = vsel %vm273, 0, %v359
    %v362 = vcosq.f32.pop %v360
    %v363 = vsinq.f32.pop %v360
    %vm364 = vweird.f32 %v62
    %v365 = vadd.s32 %v361, 3
    %v366 = vand.u32 %v365, 3
    %vm367 = vcmp.lt.s32.totalorder %v366, 2
    %vm368 = vcmp.eq.s32.totalorder %v366, 0
    %v369 = vxor.u32 %v363, 2147483648
    %v370 = vsel %vm368, %v362, %v369
    %vm371 = vcmp.eq.s32.totalorder %v366, 2
    %v372 = vxor.u32 %v362, 2147483648
    %v373 = vsel %vm371, %v372, %v363
    %v374 = vsel %vm367, %v370, %v373
    %v375 = vsel %vm364, nan, %v374
    %v376 = vand.u32 2147483647, %v63
    %vm377 = vcmp.le.f32.partialorder %v376, 0.7853982
    %vm378 = vcmp.lt.s32.totalorder %v63, 0
    %v379 = vand.u32 %v63, 2139095040
    %v380 = vshrl.u32 %v379, 23
    %v381 = vsub.s32 %v380, 127
    %v382 = vand.u32 2147483647, %v63
    %v383 = vand.u32 %v382, 8388607
    %v384 = vor.u32 %v383, 8388608
    %v385 = vsub.s32 0, %v384
    %v386 = vadd.s32 %v381, 1
    %vm387 = vcmp.gt.s32.totalorder %v386, 0
    %v388 = vsel %vm387, %v386, 0
    %v389 = vshrl.u32 %v388, 5
    %v390 = vand.u32 %v388, 31
    %v391 = vsub.s32 32, %v390
    %v392 = vshrl.u32 683565275, %v391
    %v393 = vshll.u32 683565275, %v390
    %v394 = vshrl.u32 2475754826, %v391
    %v395 = vor.u32 %v393, %v394
    %v396 = vshll.u32 2475754826, %v390
    %v397 = vshrl.u32 2131351028, %v391
    %v398 = vor.u32 %v396, %v397
    %v399 = vshll.u32 2131351028, %v390
    %v400 = vshrl.u32 2102212464, %v391
    %v401 = vor.u32 %v399, %v400
    %v402 = vshll.u32 2102212464, %v390
    %v403 = vshrl.u32 920167782, %v391
    %v404 = vor.u32 %v402, %v403
    %v405 = vshll.u32 920167782, %v390
    %v406 = vshrl.u32 1326507024, %v391
    %v407 = vor.u32 %v405, %v406
    %vm408 = vcmp.lt.s32.totalorder %v389, 1
    %vm409 = vcmp.lt.s32.totalorder %v389, 2
    %vm410 = vcmp.lt.s32.totalorder %v389, 3
    %vm411 = vcmp.lt.s32.totalorder %v389, 4
    %v412 = vsel %vm408, %v392, %v395
    %v413 = vsel %vm411, %v401, 2102212464
    %v414 = vsel %vm410, %v398, %v413
    %v415 = vsel %vm409, %v412, %v414
    %v416 = vsel %vm408, %v395, %v398
    %v417 = vsel %vm411, %v404, 920167782
    %v418 = vsel %vm410, %v401, %v417
    %v419 = vsel %vm409, %v416, %v418
    %v420 = vsel %vm408, %v398, %v401
    %v421 = vsel %vm411, %v407, 1326507024
    %v422 = vsel %vm410, %v404, %v421
    %v423 = vsel %vm409, %v420, %v422
    %v424 = vshll.u32 %v384, 8
    %v425 = vmul.u32.u64.compose %v424, %v423
    %v426 = vextract.low.u32 %v425
    %v427 = vextract.high.u32 %v425
    %v428 = vmul.u32.u64.compose %v424, %v419
    %v429 = vextract.low.u32 %v428
    %v430 = vextract.high.u32 %v428
    %v431 = vmul.u32 %v424, %v415
    %v432 = vadd.s32 %v427, %v429
    %vm433 = vc.u32 %v427, %v429
    %v434 = vadd.s32 %v430, 1
    %v435 = vsel %vm433, %v434, %v430
    %v436 = vadd.s32 %v431, %v435
    %v437 = vadd.s32 %v436, 536870912
    %v438 = vshrl.u32 %v437, 30
    %v439 = vshll.u32 %v438, 30
    %v440 = vsub.s32 %v436, %v439
    %vm441 = vcmp.lt.s32.totalorder %v440, 0
    %v442 = vsub.s32 0, %v440
    %v443 = vsel %vm441, %v442, %v440
    %v444 = vclz %v443
    %v445 = vsub.s32 %v444, 2
    %vm446 = vcmp.gt.s32.totalorder 0, %v445
    %v447 = vsel %vm446, 0, %v445
    %v448 = vsub.s32 32, %v447
    %v449 = vshll.u32 %v440, %v447
    %v450 = vshrl.u32 %v432, %v448
    %v451 = vor.u32 %v449, %v450
    %v452 = vsub.s32 4294967266, %v447
    %v453 = vadd.s32 %v452, 127
    %v454 = vshll.u32 %v453, 23
    %v455 = vor.u32 4788187, %v454
    %v456 = vand.u32 2147483647, %v455
    %v458 = vcvt.s32.f32 %v451
    %v459 = vmul.f32 %v458, %v456
    %v460 = vxor.u32 %v459, 2147483648
    %v461 = vsel %vm378, %v460, %v459
    %v462 = vsub.s32 4, %v438
    %v463 = vsel %vm378, %v462, %v438
    %v464 = vsel %vm377, %v63, %v461
    %v465 = vsel %vm377, 0, %v463
    %v466 = vcosq.f32.pop %v464
    %v467 = vsinq.f32.pop %v464
    %vm468 = vweird.f32 %v63
    %v469 = vadd.s32 %v465, 3
    %v470 = vand.u32 %v469, 3
    %vm471 = vcmp.lt.s32.totalorder %v470, 2
    %vm472 = vcmp.eq.s32.totalorder %v470, 0
    %v473 = vxor.u32 %v467, 2147483648
    %v474 = vsel %vm472, %v466, %v473
    %vm475 = vcmp.eq.s32.totalorder %v470, 2
    %v476 = vxor.u32 %v466, 2147483648
    %v477 = vsel %vm475, %v476, %v467
    %v478 = vsel %vm471, %v474, %v477
    %v479 = vsel %vm468, nan, %v478
    %480 = vst [vmem:[#allocation8] sm:$0xff] %v375
    %481 = vst [vmem:[#allocation8 + $0x8] sm:$0xff] %v479
    // Predicated region
    $region18: #{tpu_custom_call.1} parent=1 // pred_check
      _
    $region19: #{tpu_custom_call.1} parent=1 // pred_check_branch
      %483 = sbr.rel (0) target = $region21
    $region20: #{tpu_custom_call.1} parent=1 // pred_region
      %s485 = ssub.s32 256, 256
      %486 = vsyncadd [#allocation4], %s485
      %s487 = sshll.u32 [#allocation7], 4
      %s488 = int_to_ptr.vmem [resolvable:$true] %s487
      %493 = dma.vmem_to_hbm [thread:$0]  %s488, 256, %s2, [#allocation4], 128, 128, 8
    $region21: #{tpu_custom_call.1} parent=1 // pred_fallthru
      _
    // Predicated region
    $region22: #{tpu_custom_call.1} parent=1 // pred_check
      _
    $region23: #{tpu_custom_call.1} parent=1 // pred_check_branch
      %495 = sbr.rel (0) target = $region25
    $region24: #{tpu_custom_call.1} parent=1 // pred_region
      %s497 = ssub.s32 256, 256
      %498 = vsyncadd [#allocation9], %s497
      %s499 = sshll.u32 [#allocation8], 4
      %s500 = int_to_ptr.vmem [resolvable:$true] %s499
      %505 = dma.vmem_to_hbm [thread:$0]  %s500, 256, %s3, [#allocation9], 128, 128, 8
    $region25: #{tpu_custom_call.1} parent=1 // pred_fallthru
      _
    // Predicated region
    $region26: #{tpu_custom_call.1} parent=1 // pred_check
      _
    $region27: #{tpu_custom_call.1} parent=1 // pred_check_branch
      %507 = sbr.rel (0) target = $region29
    $region28: #{tpu_custom_call.1} parent=1 // pred_region
      %508 = dma.done [#allocation4], 256
    $region29: #{tpu_custom_call.1} parent=1 // pred_fallthru
      _
    // Predicated region
    $region30: #{tpu_custom_call.1} parent=1 // pred_check
      _
    $region31: #{tpu_custom_call.1} parent=1 // pred_check_branch
      %510 = sbr.rel (0) target = $region33
    $region32: #{tpu_custom_call.1} parent=1 // pred_region
      %511 = dma.done [#allocation9], 256
    $region33: #{tpu_custom_call.1} parent=1 // pred_fallthru
      _
    %512 = vsyncpa [#allocation3], 1
    %513 = vsyncpa [#allocation6], 1
    %514 = vsyncpa [#allocation4], 1
    %515 = vsyncpa [#allocation9], 1

</llo_original>
